<compile_context>
chip_gen: v7x
topology: tpu7x:2x2x1
jax: 0.10.0
libtpu: 0.0.40
codegen_flags: <defaults>
</compile_context>

<pallas_src>
import functools

import jax
import jax.numpy as jnp
import numpy as np
from jax.experimental import pallas as pl
from jax.experimental.pallas import tpu as pltpu


# ----------------------------------------------------------------------------
# Parameter construction (deterministic, mirrors torchaudio defaults)
# ----------------------------------------------------------------------------
def _hz_to_mel_htk(freq):
    return 2595.0 * np.log10(1.0 + freq / 700.0)


def _mel_to_hz_htk(mel):
    return 700.0 * (10.0 ** (mel / 2595.0) - 1.0)


def melscale_fbanks(n_freqs, f_min, f_max, n_mels, sample_rate):
    """torchaudio.functional.melscale_fbanks (norm=None, mel_scale='htk')."""
    all_freqs = np.linspace(0.0, sample_rate // 2, n_freqs)
    m_pts = np.linspace(_hz_to_mel_htk(f_min), _hz_to_mel_htk(f_max), n_mels + 2)
    f_pts = _mel_to_hz_htk(m_pts)
    f_diff = f_pts[1:] - f_pts[:-1]                       # (n_mels + 1,)
    slopes = f_pts[None, :] - all_freqs[:, None]          # (n_freqs, n_mels + 2)
    down_slopes = (-1.0 * slopes[:, :-2]) / f_diff[:-1]
    up_slopes = slopes[:, 2:] / f_diff[1:]
    fb = np.maximum(0.0, np.minimum(down_slopes, up_slopes))
    return fb.astype(np.float32)                          # (n_freqs, n_mels)


def hann_window_periodic(n):
    k = np.arange(n, dtype=np.float64)
    return 0.5 - 0.5 * np.cos(2.0 * np.pi * k / n)


def dft_matrices(n_fft):
    """Real/imag one-sided DFT bases of shape (n_fft, n_fft//2 + 1), float64."""
    n_freqs = n_fft // 2 + 1
    n = np.arange(n_fft, dtype=np.float64)[:, None]
    f = np.arange(n_freqs, dtype=np.float64)[None, :]
    ang = 2.0 * np.pi * n * f / n_fft
    return np.cos(ang), -np.sin(ang)


def _round_up(x, m):
    return ((x + m - 1) // m) * m


def _cdiv(a, b):
    return (a + b - 1) // b


# ----------------------------------------------------------------------------
# Pallas kernel: in-kernel framing (K-chunked STFT matmul) + power + mel + log
# ----------------------------------------------------------------------------
def logmel_kernel(xm_ref, xn_ref, basis_ref, fb_ref, out_ref, *, hop, nchunks):
    # xm_ref   : (TM, hop)            f32   sample rows; row t starts frame (tile_base + t)
    # xn_ref   : (E, hop)             f32   first E rows of the next tile (window overhang)
    # basis_ref: (nchunks*hop, C)     bf16  [hann*cos | hann*sin] packed cols, zero-padded
    # fb_ref   : (C, n_mels_pad)      bf16  mel fbank rows duplicated for the re/im groups
    # out_ref  : (TM, n_mels_pad)     f32
    xm = xm_ref[...]
    xn = xn_ref[...]

    # STFT as a K-chunked matmul: frame t spans sample rows [t, t + nchunks), so the
    # LHS of chunk c is this tile's sample slab shifted down by c rows.
    spec = None
    for c in range(nchunks):                                          # unrolled (2-4)
        lhs = xm if c == 0 else jnp.concatenate([xm[c:, :], xn[:c, :]], axis=0)
        part = jnp.dot(lhs.astype(jnp.bfloat16),
                       basis_ref[c * hop:(c + 1) * hop, :],
                       preferred_element_type=jnp.float32)            # (TM, C) f32 acc
        spec = part if spec is None else spec + part

    # |STFT|^2: squaring every packed column yields re^2 and im^2; the duplicated
    # filterbank rows sum them inside the mel matmul (no misaligned lane slices).
    power = spec * spec
    mel = jnp.dot(power.astype(jnp.bfloat16), fb_ref[...],
                  preferred_element_type=jnp.float32)                 # (TM, n_mels_pad)
    out_ref[...] = jnp.log(jnp.maximum(mel, 1e-9))


def log_melspectrogram(wav, sample_rate, fft_window_ms, fft_hop_ms, f_min, n_mels,
                       frame_tile=512, trim_output=True):
    """wav: (1, num_samples) float32.

    Returns (n_frames, n_mels) float32 (trim_output=True, matches the PyTorch module),
    or the padded (n_frames_pad, 128) slab (trim_output=False) to skip the slice pass.
    """
    # int() truncation mirrors the PyTorch module's constructor exactly (values are
    # exact integers for typical configs; non-integral products truncate identically).
    n_fft = int(sample_rate * fft_window_ms / 1000)
    hop = int(sample_rate * fft_hop_ms / 1000)
    n_freqs = n_fft // 2 + 1
    f_max = float(sample_rate // 2)

    x = wav.reshape(-1).astype(jnp.float32)
    num_samples = x.shape[0]

    # center=True reflect padding (torch.stft default pad_mode="reflect").
    pad = n_fft // 2
    x_padded = jnp.pad(x, (pad, pad), mode="reflect")
    n_frames = 1 + num_samples // hop

    # --- tiling / padded dimensions -------------------------------------------
    n_mels_pad = _round_up(n_mels, 128)              # lane-dense output stores
    nchunks = _cdiv(n_fft, hop)                      # K chunks per frame
    k_pad = nchunks * hop                            # basis rows (zero-padded K)
    ncols = _round_up(2 * n_freqs, 128)              # packed re|im lane groups

    # frames/tile: >=128, <=frame_tile, and aim for >=2 grid steps (feeds both v7x TCs).
    tm = max(128, min(frame_tile, _round_up(_cdiv(n_frames, 2), 128)))
    n_frames_pad = _round_up(n_frames, tm)
    grid = (n_frames_pad // tm,)

    # Overhang rows a tile borrows from the next tile (power of two so it divides tm).
    extra_rows = 8
    while extra_rows < nchunks - 1:
        extra_rows *= 2
    assert tm % extra_rows == 0

    # --- waveform laid out as (rows, hop); row t is the start of frame t --------
    n_rows_total = n_frames_pad + extra_rows
    total_samples = n_rows_total * hop
    if x_padded.shape[0] < total_samples:
        x2 = jnp.pad(x_padded, (0, total_samples - x_padded.shape[0]))
    else:
        # trailing samples only feed frames that are discarded anyway
        x2 = x_padded[:total_samples]
    x2 = x2.reshape(n_rows_total, hop)

    # --- deterministic constants: window folded into packed bf16 DFT basis ------
    window = hann_window_periodic(n_fft)[:, None]                    # (n_fft, 1) f64
    cos_np, sin_np = dft_matrices(n_fft)                             # (n_fft, n_freqs)
    basis_np = np.zeros((k_pad, ncols), dtype=np.float32)
    basis_np[:n_fft, :n_freqs] = window * cos_np
    basis_np[:n_fft, n_freqs:2 * n_freqs] = window * sin_np
    basis = jnp.asarray(basis_np, dtype=jnp.bfloat16)

    fb_np = melscale_fbanks(n_freqs, f_min, f_max, n_mels, sample_rate)
    fb2_np = np.zeros((ncols, n_mels_pad), dtype=np.float32)
    fb2_np[:n_freqs, :n_mels] = fb_np                     # re^2 columns
    fb2_np[n_freqs:2 * n_freqs, :n_mels] = fb_np          # im^2 columns
    fb2 = jnp.asarray(fb2_np, dtype=jnp.bfloat16)

    out = pl.pallas_call(
        functools.partial(logmel_kernel, hop=hop, nchunks=nchunks),
        out_shape=jax.ShapeDtypeStruct((n_frames_pad, n_mels_pad), jnp.float32),
        grid=grid,
        in_specs=[
            pl.BlockSpec((tm, hop), lambda i: (i, 0)),                    # this tile's rows
            pl.BlockSpec((extra_rows, hop),
                         lambda i: ((i + 1) * (tm // extra_rows), 0)),    # overhang rows
            pl.BlockSpec((k_pad, ncols), lambda i: (0, 0)),               # resident const
            pl.BlockSpec((ncols, n_mels_pad), lambda i: (0, 0)),          # resident const
        ],
        out_specs=pl.BlockSpec((tm, n_mels_pad), lambda i: (i, 0)),
        compiler_params=pltpu.CompilerParams(
            dimension_semantics=("parallel",),       # independent frame tiles
            vmem_limit_bytes=16 * 1024 * 1024,       # right-sized; footprint is ~4 MiB
        ),
    )(x2, x2, basis, fb2)

    if not trim_output:
        return out                                   # padded (n_frames_pad, 128) slab
    return out[:n_frames, :n_mels]


# ----------------------------------------------------------------------------
# Pure NumPy float64 reference (same torchaudio-default semantics), for checking
# ----------------------------------------------------------------------------
def _reference_logmel(wav_np, sample_rate, fft_window_ms, fft_hop_ms, f_min, n_mels):
    n_fft = int(sample_rate * fft_window_ms / 1000)
    hop = int(sample_rate * fft_hop_ms / 1000)
    n_freqs = n_fft // 2 + 1
    x = np.asarray(wav_np, dtype=np.float64).reshape(-1)
    xp = np.pad(x, (n_fft // 2, n_fft // 2), mode="reflect")
    n_frames = 1 + x.shape[0] // hop
    idx = np.arange(n_frames)[:, None] * hop + np.arange(n_fft)[None, :]
    frames = xp[idx] * hann_window_periodic(n_fft)[None, :]
    cos_np, sin_np = dft_matrices(n_fft)
    power = (frames @ cos_np) ** 2 + (frames @ sin_np) ** 2
    fb = melscale_fbanks(n_freqs, f_min, float(sample_rate // 2), n_mels,
                         sample_rate).astype(np.float64)
    return np.log(np.maximum(power @ fb, 1e-9))


if __name__ == "__main__":
    key = jax.random.PRNGKey(0)

    # Config A: 16 ms window / 8 ms hop @ 16 kHz -> n_fft=256, hop=128 (hop | n_fft).
    sr, win_ms, hop_ms, f_min, n_mels = 16000, 16.0, 8.0, 0.0, 40
    num_samples = 1024
    wav = jax.random.normal(key, (1, num_samples), dtype=jnp.float32)
    out = log_melspectrogram(wav, sr, win_ms, hop_ms, f_min, n_mels)
    jax.block_until_ready(out)
    assert out.shape == (1 + num_samples // 128, n_mels), out.shape
    assert bool(jnp.all(jnp.isfinite(out)))
    ref = _reference_logmel(np.asarray(wav), sr, win_ms, hop_ms, f_min, n_mels)
    mean_err = float(jnp.mean(jnp.abs(out - ref)))
    assert mean_err < 5e-2, mean_err          # bf16 MXU operands -> ~1e-2 expected

    # Config B: dvector-style 25 ms / 10 ms -> n_fft=400, hop=160 (hop does not
    # divide n_fft; exercises the zero-padded final K chunk and non-128 lane width).
    sr2, win2, hop2, f_min2, n_mels2 = 16000, 25.0, 10.0, 50.0, 40
    wav2 = jax.random.normal(jax.random.PRNGKey(1), (1, 2048), dtype=jnp.float32)
    out2 = log_melspectrogram(wav2, sr2, win2, hop2, f_min2, n_mels2)
    jax.block_until_ready(out2)
    assert out2.shape == (1 + 2048 // 160, n_mels2), out2.shape
    assert bool(jnp.all(jnp.isfinite(out2)))
    ref2 = _reference_logmel(np.asarray(wav2), sr2, win2, hop2, f_min2, n_mels2)
    mean_err2 = float(jnp.mean(jnp.abs(out2 - ref2)))
    assert mean_err2 < 5e-2, mean_err2

    print("KERNEL_OK")
</pallas_src>

<mosaic_0001>
module attributes {stable_mosaic.version = 11 : i64} {
  func.func @logmel_kernel(%arg0: i32, %arg1: memref<128x128xf32, #tpu.memory_space<vmem>>, %arg2: memref<8x128xf32, #tpu.memory_space<vmem>>, %arg3: memref<256x384xbf16, #tpu.memory_space<vmem>>, %arg4: memref<384x128xbf16, #tpu.memory_space<vmem>>, %arg5: memref<128x128xf32, #tpu.memory_space<vmem>>) attributes {dimension_semantics = [#tpu.dimension_semantics<parallel>], iteration_bounds = array<i64: 1>, scalar_prefetch = 0 : i64, scratch_operands = 0 : i64, tpu.core_type = #tpu.core_type<tc>, window_params = [{transform_indices = @transform_0, window_bounds = array<i64: 128, 128>}, {transform_indices = @transform_1, window_bounds = array<i64: 8, 128>}, {pipeline_mode = #tpu.pipeline_mode<synchronous>, transform_indices = @transform_2, window_bounds = array<i64: 256, 384>}, {pipeline_mode = #tpu.pipeline_mode<synchronous>, transform_indices = @transform_3, window_bounds = array<i64: 384, 128>}, {transform_indices = @transform_4, window_bounds = array<i64: 128, 128>}]} {
    %c0 = arith.constant 0 : index
    %c0_0 = arith.constant 0 : index
    %0 = vector.load %arg1[%c0, %c0_0] : memref<128x128xf32, #tpu.memory_space<vmem>>, vector<128x128xf32>
    %c0_1 = arith.constant 0 : index
    %c0_2 = arith.constant 0 : index
    %1 = vector.load %arg2[%c0_1, %c0_2] : memref<8x128xf32, #tpu.memory_space<vmem>>, vector<8x128xf32>
    %2 = arith.truncf %0 : vector<128x128xf32> to vector<128x128xbf16>
    %c0_3 = arith.constant 0 : index
    %c0_4 = arith.constant 0 : index
    %3 = vector.load %arg3[%c0_3, %c0_4] : memref<256x384xbf16, #tpu.memory_space<vmem>>, vector<128x384xbf16>
    %cst = arith.constant dense<0.000000e+00> : vector<128x384xf32>
    %4 = tpu.matmul %2, %3, %cst {dimension_numbers = #tpu.dot_dimension_numbers<[1], [0], [0], [1], [0, 0, 1, 1], [], []>} : vector<128x128xbf16>, vector<128x384xbf16>, vector<128x384xf32> -> vector<128x384xf32>
    %5 = vector.extract_strided_slice %0 {offsets = [1, 0], sizes = [127, 128], strides = [1, 1]} : vector<128x128xf32> to vector<127x128xf32>
    %6 = vector.extract_strided_slice %1 {offsets = [0, 0], sizes = [1, 128], strides = [1, 1]} : vector<8x128xf32> to vector<1x128xf32>
    %7 = tpu.concatenate %5, %6 in 0 : vector<127x128xf32>, vector<1x128xf32> -> vector<128x128xf32>
    %8 = arith.truncf %7 : vector<128x128xf32> to vector<128x128xbf16>
    %c128 = arith.constant 128 : index
    %c0_5 = arith.constant 0 : index
    %9 = vector.load %arg3[%c128, %c0_5] : memref<256x384xbf16, #tpu.memory_space<vmem>>, vector<128x384xbf16>
    %cst_6 = arith.constant dense<0.000000e+00> : vector<128x384xf32>
    %10 = tpu.matmul %8, %9, %cst_6 {dimension_numbers = #tpu.dot_dimension_numbers<[1], [0], [0], [1], [0, 0, 1, 1], [], []>} : vector<128x128xbf16>, vector<128x384xbf16>, vector<128x384xf32> -> vector<128x384xf32>
    %11 = arith.addf %4, %10 : vector<128x384xf32>
    %12 = arith.mulf %11, %11 : vector<128x384xf32>
    %13 = arith.truncf %12 : vector<128x384xf32> to vector<128x384xbf16>
    %c0_7 = arith.constant 0 : index
    %c0_8 = arith.constant 0 : index
    %14 = vector.load %arg4[%c0_7, %c0_8] : memref<384x128xbf16, #tpu.memory_space<vmem>>, vector<384x128xbf16>
    %cst_9 = arith.constant dense<0.000000e+00> : vector<128x128xf32>
    %15 = tpu.matmul %13, %14, %cst_9 {dimension_numbers = #tpu.dot_dimension_numbers<[1], [0], [0], [1], [0, 0, 1, 1], [], []>} : vector<128x384xbf16>, vector<384x128xbf16>, vector<128x128xf32> -> vector<128x128xf32>
    %cst_10 = arith.constant 9.99999971E-10 : f32
    %16 = vector.broadcast %cst_10 : f32 to vector<128x128xf32>
    %17 = arith.maximumf %15, %16 : vector<128x128xf32>
    %18 = math.log %17 : vector<128x128xf32>
    %c0_11 = arith.constant 0 : index
    %c0_12 = arith.constant 0 : index
    %19 = vector.load %arg5[%c0_11, %c0_12] : memref<128x128xf32, #tpu.memory_space<vmem>>, vector<128x128xf32>
    tpu.vector_store %arg5[%c0_11, %c0_12], %18 {strides = array<i32>} : memref<128x128xf32, #tpu.memory_space<vmem>>, vector<128x128xf32>,
    return
  }
  func.func @transform_0(%arg0: i32) -> (i32, i32) {
    %c0_i32 = arith.constant 0 : i32
    %c0_i32_0 = arith.constant 0 : i32
    return %arg0, %c0_i32 : i32, i32
  }
  func.func @transform_1(%arg0: i32) -> (i32, i32) {
    %c1_i32 = arith.constant 1 : i32
    %0 = arith.addi %arg0, %c1_i32 : i32
    %c16_i32 = arith.constant 16 : i32
    %1 = arith.muli %0, %c16_i32 : i32
    %c0_i32 = arith.constant 0 : i32
    %c0_i32_0 = arith.constant 0 : i32
    return %1, %c0_i32 : i32, i32
  }
  func.func @transform_2(%arg0: i32) -> (i32, i32) {
    %c0_i32 = arith.constant 0 : i32
    %c0_i32_0 = arith.constant 0 : i32
    %c0_i32_1 = arith.constant 0 : i32
    return %c0_i32, %c0_i32_0 : i32, i32
  }
  func.func @transform_3(%arg0: i32) -> (i32, i32) {
    %c0_i32 = arith.constant 0 : i32
    %c0_i32_0 = arith.constant 0 : i32
    %c0_i32_1 = arith.constant 0 : i32
    return %c0_i32, %c0_i32_0 : i32, i32
  }
  func.func @transform_4(%arg0: i32) -> (i32, i32) {
    %c0_i32 = arith.constant 0 : i32
    %c0_i32_0 = arith.constant 0 : i32
    return %arg0, %c0_i32 : i32, i32
  }
}

</mosaic_0001>

<llo_original>
// kernel: tpu_custom_call.1
$region0: #{tpu_custom_call.1}
  #allocation0 [shape = 'u32[]', space=smem, size = 0x4, offset = 0x4, fixed_abs, tag = 'smem constant byte address 0x4 - core index']
  #allocation1 [shape = 'u32[144,128]{1,0:T(1,128)}', space=vmem, size = 0x12000, scoped, tag = 'internal scratch']
  %s0 = inlined_call_operand.hbm [shape: f32[136,128], index: 0, kind: input, shape index: {}]
  %s1 = inlined_call_operand.hbm [shape: f32[136,128], index: 1, kind: input, shape index: {}]
  %s2 = inlined_call_operand.hbm [shape: bf16[256,384], index: 2, kind: input, shape index: {}]
  %s3 = inlined_call_operand.hbm [shape: bf16[384,128], index: 3, kind: input, shape index: {}]
  %s4 = inlined_call_operand.hbm [shape: f32[128,128], index: 4, kind: output, shape index: {}]
  %s5 = sld [smem:[#allocation0]]
  $region42: #{tpu_custom_call.1} parent=0
    _
  %s7 = ssub.s32 1, %s5
  %s8 = scalar_select 0, %s7, %s5
  $region1: #{tpu_custom_call.1} parent=0
    #allocation2 [shape = 'u8[65536]{0}', space=vmem, size = 0x10000, scoped, tag = 'input window, operand 0, single buffered']
    #allocation3 [shape = 's32[1]{0}', space=sflag, size = 0x4, scoped, tag = 'scoped memory for tpu_custom_call.1']
    #allocation4 [shape = 's32[1]{0}', space=sflag, size = 0x4, scoped, tag = 'scoped memory for tpu_custom_call.1']
    #allocation5 [shape = 'u8[4096]{0}', space=vmem, size = 0x1000, scoped, tag = 'input window, operand 1, single buffered']
    #allocation6 [shape = 's32[1]{0}', space=sflag, size = 0x4, scoped, tag = 'scoped memory for tpu_custom_call.1']
    #allocation7 [shape = 'u8[196608]{0}', space=vmem, size = 0x30000, scoped, tag = 'input window, operand 2, single buffered']
    #allocation8 [shape = 'u8[98304]{0}', space=vmem, size = 0x18000, scoped, tag = 'input window, operand 3, single buffered']
    #allocation9 [shape = 's32[1]{0}', space=sflag, size = 0x4, scoped, tag = 'scoped memory for tpu_custom_call.1']
    #allocation10 [shape = 'u8[65536]{0}', space=vmem, size = 0x10000, scoped, tag = 'output window, operand 0, single buffered']
    %9 = vsyncpa [#allocation3], 0
    %10 = vsyncpa [#allocation6], 0
    %11 = vsyncpa [#allocation9], 0
    %12 = vsyncpa [#allocation4], 0
    // Predicated region
    $region2: #{tpu_custom_call.1} parent=1 // pred_check
      _
    $region3: #{tpu_custom_call.1} parent=1 // pred_check_branch
      %14 = sbr.rel (0) target = $region5
    $region4: #{tpu_custom_call.1} parent=1 // pred_region
      %s16 = ssub.s32 2048, 2048
      %17 = vsyncadd [#allocation3], %s16
      %s18 = sshll.u32 [#allocation2], 4
      %s19 = int_to_ptr.vmem [resolvable:$true] %s18
      %24 = dma.hbm_to_vmem [thread:$0]  %s0, 2048, %s19, [#allocation3], 128, 128, 8
    $region5: #{tpu_custom_call.1} parent=1 // pred_fallthru
      _
    // Predicated region
    $region6: #{tpu_custom_call.1} parent=1 // pred_check
      _
    $region7: #{tpu_custom_call.1} parent=1 // pred_check_branch
      %26 = sbr.rel (0) target = $region9
    $region8: #{tpu_custom_call.1} parent=1 // pred_region
      %s27 = sadd.s32 0, 1
      %s28 = smul.u32 %s27, 16
      %s30 = ssub.s32 128, 128
      %31 = vsyncadd [#allocation6], %s30
      %s32 = smul.addr %s28, 128
      %s33 = scalar_lea.hbm %s1, %s32
      %s35 = sshll.u32 [#allocation5], 4
      %s36 = int_to_ptr.vmem [resolvable:$true] %s35
      %38 = dma.hbm_to_vmem [thread:$0]  %s33, 128, %s36, [#allocation6]
    $region9: #{tpu_custom_call.1} parent=1 // pred_fallthru
      _
    // Predicated region
    $region10: #{tpu_custom_call.1} parent=1 // pred_check
      _
    $region11: #{tpu_custom_call.1} parent=1 // pred_check_branch
      %40 = sbr.rel (0) target = $region13
    $region12: #{tpu_custom_call.1} parent=1 // pred_region
      %s42 = ssub.s32 6144, 6144
      %43 = vsyncadd [#allocation6], %s42
      %s44 = sshll.u32 [#allocation7], 4
      %s45 = int_to_ptr.vmem [resolvable:$true] %s44
      %50 = dma.hbm_to_vmem [thread:$0]  %s2, 6144, %s45, [#allocation6], 192, 192, 12
    $region13: #{tpu_custom_call.1} parent=1 // pred_fallthru
      _
    // Predicated region
    $region14: #{tpu_custom_call.1} parent=1 // pred_check
      _
    $region15: #{tpu_custom_call.1} parent=1 // pred_check_branch
      %52 = sbr.rel (0) target = $region17
    $region16: #{tpu_custom_call.1} parent=1 // pred_region
      %s54 = ssub.s32 3072, 3072
      %55 = vsyncadd [#allocation9], %s54
      %s56 = sshll.u32 [#allocation8], 4
      %s57 = int_to_ptr.vmem [resolvable:$true] %s56
      %62 = dma.hbm_to_vmem [thread:$0]  %s3, 3072, %s57, [#allocation9], 64, 64, 4
    $region17: #{tpu_custom_call.1} parent=1 // pred_fallthru
      _
    // Predicated region
    $region18: #{tpu_custom_call.1} parent=1 // pred_check
      _
    $region19: #{tpu_custom_call.1} parent=1 // pred_check_branch
      %64 = sbr.rel (0) target = $region21
    $region20: #{tpu_custom_call.1} parent=1 // pred_region
      %65 = dma.done [#allocation3], 2048
    $region21: #{tpu_custom_call.1} parent=1 // pred_fallthru
      _
    // Predicated region
    $region22: #{tpu_custom_call.1} parent=1 // pred_check
      _
    $region23: #{tpu_custom_call.1} parent=1 // pred_check_branch
      %67 = sbr.rel (0) target = $region25
    $region24: #{tpu_custom_call.1} parent=1 // pred_region
      %68 = dma.done [#allocation6], 128
    $region25: #{tpu_custom_call.1} parent=1 // pred_fallthru
      _
    // Predicated region
    $region26: #{tpu_custom_call.1} parent=1 // pred_check
      _
    $region27: #{tpu_custom_call.1} parent=1 // pred_check_branch
      %70 = sbr.rel (0) target = $region29
    $region28: #{tpu_custom_call.1} parent=1 // pred_region
      %71 = dma.done [#allocation6], 6144
    $region29: #{tpu_custom_call.1} parent=1 // pred_fallthru
      _
    // Predicated region
    $region30: #{tpu_custom_call.1} parent=1 // pred_check
      _
    $region31: #{tpu_custom_call.1} parent=1 // pred_check_branch
      %73 = sbr.rel (0) target = $region33
    $region32: #{tpu_custom_call.1} parent=1 // pred_region
      %74 = dma.done [#allocation9], 3072
    $region33: #{tpu_custom_call.1} parent=1 // pred_fallthru
      _
    %s75 = sadd.s32 0, 1
    %s76 = smul.u32 %s75, 16
    %v78 = vld [vmem:[#allocation2] sm:$0xff]
    %v79 = vld [vmem:[#allocation2 + $0x8] sm:$0xff]
    %v80 = vld [vmem:[#allocation2 + $0x10] sm:$0xff]
    %v81 = vld [vmem:[#allocation2 + $0x18] sm:$0xff]
    %v82 = vld [vmem:[#allocation2 + $0x20] sm:$0xff]
    %v83 = vld [vmem:[#allocation2 + $0x28] sm:$0xff]
    %v84 = vld [vmem:[#allocation2 + $0x30] sm:$0xff]
    %v85 = vld [vmem:[#allocation2 + $0x38] sm:$0xff]
    %v86 = vld [vmem:[#allocation2 + $0x40] sm:$0xff]
    %v87 = vld [vmem:[#allocation2 + $0x48] sm:$0xff]
    %v88 = vld [vmem:[#allocation2 + $0x50] sm:$0xff]
    %v89 = vld [vmem:[#allocation2 + $0x58] sm:$0xff]
    %v90 = vld [vmem:[#allocation2 + $0x60] sm:$0xff]
    %v91 = vld [vmem:[#allocation2 + $0x68] sm:$0xff]
    %v92 = vld [vmem:[#allocation2 + $0x70] sm:$0xff]
    %v93 = vld [vmem:[#allocation2 + $0x78] sm:$0xff]
    %v94 = vld [vmem:[#allocation5] sm:$0xff]
    %v95 = vpack.c.bf16 %v79, %v78
    %v96 = vpack.c.bf16 %v81, %v80
    %v97 = vpack.c.bf16 %v83, %v82
    %v98 = vpack.c.bf16 %v85, %v84
    %v99 = vpack.c.bf16 %v87, %v86
    %v100 = vpack.c.bf16 %v89, %v88
    %v101 = vpack.c.bf16 %v91, %v90
    %v102 = vpack.c.bf16 %v93, %v92
    %v103 = vld [vmem:[#allocation7] sm:$0xff]
    %v104 = vld [vmem:[#allocation7 + $0x8] sm:$0xf]
    %v105 = vld [vmem:[#allocation7 + $0xc] sm:$0xff]
    %v106 = vld [vmem:[#allocation7 + $0x14] sm:$0xf]
    %v107 = vld [vmem:[#allocation7 + $0x18] sm:$0xff]
    %v108 = vld [vmem:[#allocation7 + $0x20] sm:$0xf]
    %v109 = vld [vmem:[#allocation7 + $0x24] sm:$0xff]
    %v110 = vld [vmem:[#allocation7 + $0x2c] sm:$0xf]
    %v111 = vld [vmem:[#allocation7 + $0x30] sm:$0xff]
    %v112 = vld [vmem:[#allocation7 + $0x38] sm:$0xf]
    %v113 = vld [vmem:[#allocation7 + $0x3c] sm:$0xff]
    %v114 = vld [vmem:[#allocation7 + $0x44] sm:$0xf]
    %v115 = vld [vmem:[#allocation7 + $0x48] sm:$0xff]
    %v116 = vld [vmem:[#allocation7 + $0x50] sm:$0xf]
    %v117 = vld [vmem:[#allocation7 + $0x54] sm:$0xff]
    %v118 = vld [vmem:[#allocation7 + $0x5c] sm:$0xf]
    %v119 = vld [vmem:[#allocation7 + $0x60] sm:$0xff]
    %v120 = vld [vmem:[#allocation7 + $0x68] sm:$0xf]
    %v121 = vld [vmem:[#allocation7 + $0x6c] sm:$0xff]
    %v122 = vld [vmem:[#allocation7 + $0x74] sm:$0xf]
    %v123 = vld [vmem:[#allocation7 + $0x78] sm:$0xff]
    %v124 = vld [vmem:[#allocation7 + $0x80] sm:$0xf]
    %v125 = vld [vmem:[#allocation7 + $0x84] sm:$0xff]
    %v126 = vld [vmem:[#allocation7 + $0x8c] sm:$0xf]
    %v127 = vld [vmem:[#allocation7 + $0x90] sm:$0xff]
    %v128 = vld [vmem:[#allocation7 + $0x98] sm:$0xf]
    %v129 = vld [vmem:[#allocation7 + $0x9c] sm:$0xff]
    %v130 = vld [vmem:[#allocation7 + $0xa4] sm:$0xf]
    %v131 = vld [vmem:[#allocation7 + $0xa8] sm:$0xff]
    %v132 = vld [vmem:[#allocation7 + $0xb0] sm:$0xf]
    %v133 = vld [vmem:[#allocation7 + $0xb4] sm:$0xff]
    %v134 = vld [vmem:[#allocation7 + $0xbc] sm:$0xf]
    %vm151 = vcmask 1046528
    %v152 = vrot.slane %v78, 1
    %v153 = vrot.slane %v79, 1
    %v154 = vsel %vm151, %v152, %v153
    %v155 = vrot.slane %v80, 1
    %v156 = vsel %vm151, %v153, %v155
    %v157 = vrot.slane %v81, 1
    %v158 = vsel %vm151, %v155, %v157
    %v159 = vrot.slane %v82, 1
    %v160 = vsel %vm151, %v157, %v159
    %v161 = vrot.slane %v83, 1
    %v162 = vsel %vm151, %v159, %v161
    %v163 = vrot.slane %v84, 1
    %v164 = vsel %vm151, %v161, %v163
    %v165 = vrot.slane %v85, 1
    %v166 = vsel %vm151, %v163, %v165
    %v167 = vrot.slane %v86, 1
    %v168 = vsel %vm151, %v165, %v167
    %v169 = vrot.slane %v87, 1
    %v170 = vsel %vm151, %v167, %v169
    %v171 = vrot.slane %v88, 1
    %v172 = vsel %vm151, %v169, %v171
    %v173 = vrot.slane %v89, 1
    %v174 = vsel %vm151, %v171, %v173
    %v175 = vrot.slane %v90, 1
    %v176 = vsel %vm151, %v173, %v175
    %v177 = vrot.slane %v91, 1
    %v178 = vsel %vm151, %v175, %v177
    %v179 = vrot.slane %v92, 1
    %v180 = vsel %vm151, %v177, %v179
    %v181 = vrot.slane %v93, 1
    %v182 = vsel %vm151, %v179, %v181
    %v200 = vrot.slane %v94, 1
    %v202 = vsel %vm151, %v181, %v200
    %v203 = vpack.c.bf16 %v156, %v154
    %v204 = vpack.c.bf16 %v160, %v158
    %v205 = vpack.c.bf16 %v164, %v162
    %v206 = vpack.c.bf16 %v168, %v166
    %v207 = vpack.c.bf16 %v172, %v170
    %v208 = vpack.c.bf16 %v176, %v174
    %v209 = vpack.c.bf16 %v180, %v178
    %v210 = vpack.c.bf16 %v202, %v182
    %v211 = vld [vmem:[#allocation7 + $0xc0] sm:$0xff]
    %v212 = vld [vmem:[#allocation7 + $0xc8] sm:$0xf]
    %v213 = vld [vmem:[#allocation7 + $0xcc] sm:$0xff]
    %v214 = vld [vmem:[#allocation7 + $0xd4] sm:$0xf]
    %v215 = vld [vmem:[#allocation7 + $0xd8] sm:$0xff]
    %v216 = vld [vmem:[#allocation7 + $0xe0] sm:$0xf]
    %v217 = vld [vmem:[#allocation7 + $0xe4] sm:$0xff]
    %v218 = vld [vmem:[#allocation7 + $0xec] sm:$0xf]
    %v219 = vld [vmem:[#allocation7 + $0xf0] sm:$0xff]
    %v220 = vld [vmem:[#allocation7 + $0xf8] sm:$0xf]
    %v221 = vld [vmem:[#allocation7 + $0xfc] sm:$0xff]
    %v222 = vld [vmem:[#allocation7 + $0x104] sm:$0xf]
    %v223 = vld [vmem:[#allocation7 + $0x108] sm:$0xff]
    %v224 = vld [vmem:[#allocation7 + $0x110] sm:$0xf]
    %v225 = vld [vmem:[#allocation7 + $0x114] sm:$0xff]
    %v226 = vld [vmem:[#allocation7 + $0x11c] sm:$0xf]
    %v227 = vld [vmem:[#allocation7 + $0x120] sm:$0xff]
    %v228 = vld [vmem:[#allocation7 + $0x128] sm:$0xf]
    %v229 = vld [vmem:[#allocation7 + $0x12c] sm:$0xff]
    %v230 = vld [vmem:[#allocation7 + $0x134] sm:$0xf]
    %v231 = vld [vmem:[#allocation7 + $0x138] sm:$0xff]
    %v232 = vld [vmem:[#allocation7 + $0x140] sm:$0xf]
    %v233 = vld [vmem:[#allocation7 + $0x144] sm:$0xff]
    %v234 = vld [vmem:[#allocation7 + $0x14c] sm:$0xf]
    %v235 = vld [vmem:[#allocation7 + $0x150] sm:$0xff]
    %v236 = vld [vmem:[#allocation7 + $0x158] sm:$0xf]
    %v237 = vld [vmem:[#allocation7 + $0x15c] sm:$0xff]
    %v238 = vld [vmem:[#allocation7 + $0x164] sm:$0xf]
    %v239 = vld [vmem:[#allocation7 + $0x168] sm:$0xff]
    %v240 = vld [vmem:[#allocation7 + $0x170] sm:$0xf]
    %v241 = vld [vmem:[#allocation7 + $0x174] sm:$0xff]
    %v242 = vld [vmem:[#allocation7 + $0x17c] sm:$0xf]
    %v275 = vunpack.c.l.b16 %v211
    %v276 = vunpack.c.h.b16 %v211
    %v277 = vunpack.c.l.b16 %v212
    %v278 = vunpack.c.l.b16 %v213
    %v279 = vunpack.c.h.b16 %v213
    %v280 = vunpack.c.l.b16 %v214
    %v281 = vunpack.c.l.b16 %v215
    %v282 = vunpack.c.h.b16 %v215
    %v283 = vunpack.c.l.b16 %v216
    %v284 = vunpack.c.l.b16 %v217
    %v285 = vunpack.c.h.b16 %v217
    %v286 = vunpack.c.l.b16 %v218
    %v287 = vunpack.c.l.b16 %v219
    %v288 = vunpack.c.h.b16 %v219
    %v289 = vunpack.c.l.b16 %v220
    %v290 = vunpack.c.l.b16 %v221
    %v291 = vunpack.c.h.b16 %v221
    %v292 = vunpack.c.l.b16 %v222
    %v293 = vunpack.c.l.b16 %v223
    %v294 = vunpack.c.h.b16 %v223
    %v295 = vunpack.c.l.b16 %v224
    %v296 = vunpack.c.l.b16 %v225
    %v297 = vunpack.c.h.b16 %v225
    %v298 = vunpack.c.l.b16 %v226
    %v299 = vunpack.c.l.b16 %v227
    %v300 = vunpack.c.h.b16 %v227
    %v301 = vunpack.c.l.b16 %v228
    %v302 = vunpack.c.l.b16 %v229
    %v303 = vunpack.c.h.b16 %v229
    %v304 = vunpack.c.l.b16 %v230
    %v305 = vunpack.c.l.b16 %v231
    %v306 = vunpack.c.h.b16 %v231
    %v307 = vunpack.c.l.b16 %v232
    %v308 = vunpack.c.l.b16 %v233
    %v309 = vunpack.c.h.b16 %v233
    %v310 = vunpack.c.l.b16 %v234
    %v311 = vunpack.c.l.b16 %v235
    %v312 = vunpack.c.h.b16 %v235
    %v313 = vunpack.c.l.b16 %v236
    %v314 = vunpack.c.l.b16 %v237
    %v315 = vunpack.c.h.b16 %v237
    %v316 = vunpack.c.l.b16 %v238
    %v317 = vunpack.c.l.b16 %v239
    %v318 = vunpack.c.h.b16 %v239
    %v319 = vunpack.c.l.b16 %v240
    %v320 = vunpack.c.l.b16 %v241
    %v321 = vunpack.c.h.b16 %v241
    %v322 = vunpack.c.l.b16 %v242
    %v323 = vpack.c.b16 %v278, %v275
    %v324 = vpack.c.b16 %v279, %v276
    %v325 = vpack.c.b16 %v280, %v277
    %v326 = vpack.c.b16 %v284, %v281
    %v327 = vpack.c.b16 %v285, %v282
    %v328 = vpack.c.b16 %v286, %v283
    %v329 = vpack.c.b16 %v290, %v287
    %v330 = vpack.c.b16 %v291, %v288
    %v331 = vpack.c.b16 %v292, %v289
    %v332 = vpack.c.b16 %v296, %v293
    %v333 = vpack.c.b16 %v297, %v294
    %v334 = vpack.c.b16 %v298, %v295
    %v335 = vpack.c.b16 %v302, %v299
    %v336 = vpack.c.b16 %v303, %v300
    %v337 = vpack.c.b16 %v304, %v301
    %v338 = vpack.c.b16 %v308, %v305
    %v339 = vpack.c.b16 %v309, %v306
    %v340 = vpack.c.b16 %v310, %v307
    %v341 = vpack.c.b16 %v314, %v311
    %v342 = vpack.c.b16 %v315, %v312
    %v343 = vpack.c.b16 %v316, %v313
    %v344 = vpack.c.b16 %v320, %v317
    %v345 = vpack.c.b16 %v321, %v318
    %v346 = vpack.c.b16 %v322, %v319
    %371 = vmatprep.subr.bf16.mxu0 %v324
    %372 = vmatpush1.bf16.msra.mxu0 %v323
    %373 = vmatprep.subr.bf16.mxu0 %v327
    %374 = vmatpush1.bf16.msra.mxu0 %v326
    %375 = vmatprep.subr.bf16.mxu0 %v330
    %376 = vmatpush1.bf16.msra.mxu0 %v329
    %377 = vmatprep.subr.bf16.mxu0 %v333
    %378 = vmatpush1.bf16.msra.mxu0 %v332
    %379 = vmatprep.subr.bf16.mxu0 %v336
    %380 = vmatpush1.bf16.msra.mxu0 %v335
    %381 = vmatprep.subr.bf16.mxu0 %v339
    %382 = vmatpush1.bf16.msra.mxu0 %v338
    %383 = vmatprep.subr.bf16.mxu0 %v342
    %384 = vmatpush1.bf16.msra.mxu0 %v341
    %385 = vmatprep.subr.bf16.mxu0 %v345
    %386 = vmatpush1.bf16.msra.mxu0 %v344
    %387 = vmatprep.subr.bf16.mxu0 0
    %388 = vmatpush1.bf16.msra.mxu0 0
    %389 = vmatprep.subr.bf16.mxu0 0
    %390 = vmatpush1.bf16.msra.mxu0 0
    %391 = vmatprep.subr.bf16.mxu0 0
    %392 = vmatpush1.bf16.msra.mxu0 0
    %393 = vmatprep.subr.bf16.mxu0 0
    %394 = vmatpush1.bf16.msra.mxu0 0
    %395 = vmatprep.subr.bf16.mxu0 0
    %396 = vmatpush1.bf16.msra.mxu0 0
    %397 = vmatprep.subr.bf16.mxu0 0
    %398 = vmatpush1.bf16.msra.mxu0 0
    %399 = vmatprep.subr.bf16.mxu0 0
    %400 = vmatpush1.bf16.msra.mxu0 0
    %401 = vmatprep.subr.bf16.mxu0 0
    %402 = vmatpush1.bf16.msra.mxu0 0
    %403 = vmatprep.mubr.bf16.mxu0 0
    %404 = vmatmul.mubr.bf16.gmra.mrb[0].mxu0 %v203
    %v405 = vpop.f32.mrb[0].mxu0
    %v406 = vadd.f32 0.0, %v405
    %v407 = vpop.f32.mrb[0].mxu0
    %v408 = vadd.f32 0.0, %v407
    %v409 = vpop.f32.mrb[0].mxu0
    %v410 = vadd.f32 0.0, %v409
    %v411 = vpop.f32.mrb[0].mxu0
    %v412 = vadd.f32 0.0, %v411
    %413 = vmatprep.mubr.bf16.mxu0 0
    %414 = vmatmul.mubr.bf16.gmra.mrb[0].mxu0 %v204
    %v415 = vpop.f32.mrb[0].mxu0
    %v416 = vadd.f32 0.0, %v415
    %v417 = vpop.f32.mrb[0].mxu0
    %v418 = vadd.f32 0.0, %v417
    %v419 = vpop.f32.mrb[0].mxu0
    %v420 = vadd.f32 0.0, %v419
    %v421 = vpop.f32.mrb[0].mxu0
    %v422 = vadd.f32 0.0, %v421
    %423 = vmatprep.mubr.bf16.mxu0 0
    %424 = vmatmul.mubr.bf16.gmra.mrb[0].mxu0 %v205
    %v425 = vpop.f32.mrb[0].mxu0
    %v426 = vadd.f32 0.0, %v425
    %v427 = vpop.f32.mrb[0].mxu0
    %v428 = vadd.f32 0.0, %v427
    %v429 = vpop.f32.mrb[0].mxu0
    %v430 = vadd.f32 0.0, %v429
    %v431 = vpop.f32.mrb[0].mxu0
    %v432 = vadd.f32 0.0, %v431
    %433 = vmatprep.mubr.bf16.mxu0 0
    %434 = vmatmul.mubr.bf16.gmra.mrb[0].mxu0 %v206
    %v435 = vpop.f32.mrb[0].mxu0
    %v436 = vadd.f32 0.0, %v435
    %v437 = vpop.f32.mrb[0].mxu0
    %v438 = vadd.f32 0.0, %v437
    %v439 = vpop.f32.mrb[0].mxu0
    %v440 = vadd.f32 0.0, %v439
    %v441 = vpop.f32.mrb[0].mxu0
    %v442 = vadd.f32 0.0, %v441
    %443 = vmatprep.mubr.bf16.mxu0 0
    %444 = vmatmul.mubr.bf16.gmra.mrb[0].mxu0 %v207
    %v445 = vpop.f32.mrb[0].mxu0
    %v446 = vadd.f32 0.0, %v445
    %v447 = vpop.f32.mrb[0].mxu0
    %v448 = vadd.f32 0.0, %v447
    %v449 = vpop.f32.mrb[0].mxu0
    %v450 = vadd.f32 0.0, %v449
    %v451 = vpop.f32.mrb[0].mxu0
    %v452 = vadd.f32 0.0, %v451
    %453 = vmatprep.mubr.bf16.mxu0 0
    %454 = vmatmul.mubr.bf16.gmra.mrb[0].mxu0 %v208
    %v455 = vpop.f32.mrb[0].mxu0
    %v456 = vadd.f32 0.0, %v455
    %v457 = vpop.f32.mrb[0].mxu0
    %v458 = vadd.f32 0.0, %v457
    %v459 = vpop.f32.mrb[0].mxu0
    %v460 = vadd.f32 0.0, %v459
    %v461 = vpop.f32.mrb[0].mxu0
    %v462 = vadd.f32 0.0, %v461
    %463 = vmatprep.mubr.bf16.mxu0 0
    %464 = vmatmul.mubr.bf16.gmra.mrb[0].mxu0 %v209
    %v465 = vpop.f32.mrb[0].mxu0
    %v466 = vadd.f32 0.0, %v465
    %v467 = vpop.f32.mrb[0].mxu0
    %v468 = vadd.f32 0.0, %v467
    %v469 = vpop.f32.mrb[0].mxu0
    %v470 = vadd.f32 0.0, %v469
    %v471 = vpop.f32.mrb[0].mxu0
    %v472 = vadd.f32 0.0, %v471
    %473 = vmatprep.mubr.bf16.mxu0 0
    %474 = vmatmul.mubr.bf16.gmra.mrb[0].mxu0 %v210
    %v475 = vpop.f32.mrb[0].mxu0
    %v476 = vadd.f32 0.0, %v475
    %v477 = vpop.f32.mrb[0].mxu0
    %v478 = vadd.f32 0.0, %v477
    %v479 = vpop.f32.mrb[0].mxu0
    %v480 = vadd.f32 0.0, %v479
    %v481 = vpop.f32.mrb[0].mxu0
    %v482 = vadd.f32 0.0, %v481
    %483 = vdwg.mxu0
    %484 = vmatprep.subr.bf16.mxu0 0
    %485 = vmatpush1.bf16.msra.mxu0 %v325
    %486 = vmatprep.subr.bf16.mxu0 0
    %487 = vmatpush1.bf16.msra.mxu0 %v328
    %488 = vmatprep.subr.bf16.mxu0 0
    %489 = vmatpush1.bf16.msra.mxu0 %v331
    %490 = vmatprep.subr.bf16.mxu0 0
    %491 = vmatpush1.bf16.msra.mxu0 %v334
    %492 = vmatprep.subr.bf16.mxu0 0
    %493 = vmatpush1.bf16.msra.mxu0 %v337
    %494 = vmatprep.subr.bf16.mxu0 0
    %495 = vmatpush1.bf16.msra.mxu0 %v340
    %496 = vmatprep.subr.bf16.mxu0 0
    %497 = vmatpush1.bf16.msra.mxu0 %v343
    %498 = vmatprep.subr.bf16.mxu0 0
    %499 = vmatpush1.bf16.msra.mxu0 %v346
    %500 = vmatprep.subr.bf16.mxu0 0
    %501 = vmatpush1.bf16.msra.mxu0 0
    %502 = vmatprep.subr.bf16.mxu0 0
    %503 = vmatpush1.bf16.msra.mxu0 0
    %504 = vmatprep.subr.bf16.mxu0 0
    %505 = vmatpush1.bf16.msra.mxu0 0
    %506 = vmatprep.subr.bf16.mxu0 0
    %507 = vmatpush1.bf16.msra.mxu0 0
    %508 = vmatprep.subr.bf16.mxu0 0
    %509 = vmatpush1.bf16.msra.mxu0 0
    %510 = vmatprep.subr.bf16.mxu0 0
    %511 = vmatpush1.bf16.msra.mxu0 0
    %512 = vmatprep.subr.bf16.mxu0 0
    %513 = vmatpush1.bf16.msra.mxu0 0
    %514 = vmatprep.subr.bf16.mxu0 0
    %515 = vmatpush1.bf16.msra.mxu0 0
    %516 = vmatprep.mubr.bf16.mxu0 0
    %517 = vmatmul.mubr.bf16.gmra.mrb[0].mxu0 %v203
    %v518 = vpop.f32.mrb[0].mxu0
    %v519 = vadd.f32 0.0, %v518
    %v520 = vpop.f32.mrb[0].mxu0
    %v521 = vpop.f32.mrb[0].mxu0
    %v522 = vadd.f32 0.0, %v521
    %v523 = vpop.f32.mrb[0].mxu0
    %524 = vmatprep.mubr.bf16.mxu0 0
    %525 = vmatmul.mubr.bf16.gmra.mrb[0].mxu0 %v204
    %v526 = vpop.f32.mrb[0].mxu0
    %v527 = vadd.f32 0.0, %v526
    %v528 = vpop.f32.mrb[0].mxu0
    %v529 = vpop.f32.mrb[0].mxu0
    %v530 = vadd.f32 0.0, %v529
    %v531 = vpop.f32.mrb[0].mxu0
    %532 = vmatprep.mubr.bf16.mxu0 0
    %533 = vmatmul.mubr.bf16.gmra.mrb[0].mxu0 %v205
    %v534 = vpop.f32.mrb[0].mxu0
    %v535 = vadd.f32 0.0, %v534
    %v536 = vpop.f32.mrb[0].mxu0
    %v537 = vpop.f32.mrb[0].mxu0
    %v538 = vadd.f32 0.0, %v537
    %v539 = vpop.f32.mrb[0].mxu0
    %540 = vmatprep.mubr.bf16.mxu0 0
    %541 = vmatmul.mubr.bf16.gmra.mrb[0].mxu0 %v206
    %v542 = vpop.f32.mrb[0].mxu0
    %v543 = vadd.f32 0.0, %v542
    %v544 = vpop.f32.mrb[0].mxu0
    %v545 = vpop.f32.mrb[0].mxu0
    %v546 = vadd.f32 0.0, %v545
    %v547 = vpop.f32.mrb[0].mxu0
    %548 = vmatprep.mubr.bf16.mxu0 0
    %549 = vmatmul.mubr.bf16.gmra.mrb[0].mxu0 %v207
    %v550 = vpop.f32.mrb[0].mxu0
    %v551 = vadd.f32 0.0, %v550
    %v552 = vpop.f32.mrb[0].mxu0
    %v553 = vpop.f32.mrb[0].mxu0
    %v554 = vadd.f32 0.0, %v553
    %v555 = vpop.f32.mrb[0].mxu0
    %556 = vmatprep.mubr.bf16.mxu0 0
    %557 = vmatmul.mubr.bf16.gmra.mrb[0].mxu0 %v208
    %v558 = vpop.f32.mrb[0].mxu0
    %v559 = vadd.f32 0.0, %v558
    %v560 = vpop.f32.mrb[0].mxu0
    %v561 = vpop.f32.mrb[0].mxu0
    %v562 = vadd.f32 0.0, %v561
    %v563 = vpop.f32.mrb[0].mxu0
    %564 = vmatprep.mubr.bf16.mxu0 0
    %565 = vmatmul.mubr.bf16.gmra.mrb[0].mxu0 %v209
    %v566 = vpop.f32.mrb[0].mxu0
    %v567 = vadd.f32 0.0, %v566
    %v568 = vpop.f32.mrb[0].mxu0
    %v569 = vpop.f32.mrb[0].mxu0
    %v570 = vadd.f32 0.0, %v569
    %v571 = vpop.f32.mrb[0].mxu0
    %572 = vmatprep.mubr.bf16.mxu0 0
    %573 = vmatmul.mubr.bf16.gmra.mrb[0].mxu0 %v210
    %v574 = vpop.f32.mrb[0].mxu0
    %v575 = vadd.f32 0.0, %v574
    %v576 = vpop.f32.mrb[0].mxu0
    %v577 = vpop.f32.mrb[0].mxu0
    %v578 = vadd.f32 0.0, %v577
    %v579 = vpop.f32.mrb[0].mxu0
    %580 = vdwg.mxu0
    %v613 = vunpack.c.l.b16 %v103
    %v614 = vunpack.c.h.b16 %v103
    %v615 = vunpack.c.l.b16 %v104
    %v616 = vunpack.c.l.b16 %v105
    %v617 = vunpack.c.h.b16 %v105
    %v618 = vunpack.c.l.b16 %v106
    %v619 = vunpack.c.l.b16 %v107
    %v620 = vunpack.c.h.b16 %v107
    %v621 = vunpack.c.l.b16 %v108
    %v622 = vunpack.c.l.b16 %v109
    %v623 = vunpack.c.h.b16 %v109
    %v624 = vunpack.c.l.b16 %v110
    %v625 = vunpack.c.l.b16 %v111
    %v626 = vunpack.c.h.b16 %v111
    %v627 = vunpack.c.l.b16 %v112
    %v628 = vunpack.c.l.b16 %v113
    %v629 = vunpack.c.h.b16 %v113
    %v630 = vunpack.c.l.b16 %v114
    %v631 = vunpack.c.l.b16 %v115
    %v632 = vunpack.c.h.b16 %v115
    %v633 = vunpack.c.l.b16 %v116
    %v634 = vunpack.c.l.b16 %v117
    %v635 = vunpack.c.h.b16 %v117
    %v636 = vunpack.c.l.b16 %v118
    %v637 = vunpack.c.l.b16 %v119
    %v638 = vunpack.c.h.b16 %v119
    %v639 = vunpack.c.l.b16 %v120
    %v640 = vunpack.c.l.b16 %v121
    %v641 = vunpack.c.h.b16 %v121
    %v642 = vunpack.c.l.b16 %v122
    %v643 = vunpack.c.l.b16 %v123
    %v644 = vunpack.c.h.b16 %v123
    %v645 = vunpack.c.l.b16 %v124
    %v646 = vunpack.c.l.b16 %v125
    %v647 = vunpack.c.h.b16 %v125
    %v648 = vunpack.c.l.b16 %v126
    %v649 = vunpack.c.l.b16 %v127
    %v650 = vunpack.c.h.b16 %v127
    %v651 = vunpack.c.l.b16 %v128
    %v652 = vunpack.c.l.b16 %v129
    %v653 = vunpack.c.h.b16 %v129
    %v654 = vunpack.c.l.b16 %v130
    %v655 = vunpack.c.l.b16 %v131
    %v656 = vunpack.c.h.b16 %v131
    %v657 = vunpack.c.l.b16 %v132
    %v658 = vunpack.c.l.b16 %v133
    %v659 = vunpack.c.h.b16 %v133
    %v660 = vunpack.c.l.b16 %v134
    %v661 = vpack.c.b16 %v616, %v613
    %v662 = vpack.c.b16 %v617, %v614
    %v663 = vpack.c.b16 %v618, %v615
    %v664 = vpack.c.b16 %v622, %v619
    %v665 = vpack.c.b16 %v623, %v620
    %v666 = vpack.c.b16 %v624, %v621
    %v667 = vpack.c.b16 %v628, %v625
    %v668 = vpack.c.b16 %v629, %v626
    %v669 = vpack.c.b16 %v630, %v627
    %v670 = vpack.c.b16 %v634, %v631
    %v671 = vpack.c.b16 %v635, %v632
    %v672 = vpack.c.b16 %v636, %v633
    %v673 = vpack.c.b16 %v640, %v637
    %v674 = vpack.c.b16 %v641, %v638
    %v675 = vpack.c.b16 %v642, %v639
    %v676 = vpack.c.b16 %v646, %v643
    %v677 = vpack.c.b16 %v647, %v644
    %v678 = vpack.c.b16 %v648, %v645
    %v679 = vpack.c.b16 %v652, %v649
    %v680 = vpack.c.b16 %v653, %v650
    %v681 = vpack.c.b16 %v654, %v651
    %v682 = vpack.c.b16 %v658, %v655
    %v683 = vpack.c.b16 %v659, %v656
    %v684 = vpack.c.b16 %v660, %v657
    %709 = vmatprep.subr.bf16.mxu0 %v662
    %710 = vmatpush1.bf16.msra.mxu0 %v661
    %711 = vmatprep.subr.bf16.mxu0 %v665
    %712 = vmatpush1.bf16.msra.mxu0 %v664
    %713 = vmatprep.subr.bf16.mxu0 %v668
    %714 = vmatpush1.bf16.msra.mxu0 %v667
    %715 = vmatprep.subr.bf16.mxu0 %v671
    %716 = vmatpush1.bf16.msra.mxu0 %v670
    %717 = vmatprep.subr.bf16.mxu0 %v674
    %718 = vmatpush1.bf16.msra.mxu0 %v673
    %719 = vmatprep.subr.bf16.mxu0 %v677
    %720 = vmatpush1.bf16.msra.mxu0 %v676
    %721 = vmatprep.subr.bf16.mxu0 %v680
    %722 = vmatpush1.bf16.msra.mxu0 %v679
    %723 = vmatprep.subr.bf16.mxu0 %v683
    %724 = vmatpush1.bf16.msra.mxu0 %v682
    %725 = vmatprep.subr.bf16.mxu0 0
    %726 = vmatpush1.bf16.msra.mxu0 0
    %727 = vmatprep.subr.bf16.mxu0 0
    %728 = vmatpush1.bf16.msra.mxu0 0
    %729 = vmatprep.subr.bf16.mxu0 0
    %730 = vmatpush1.bf16.msra.mxu0 0
    %731 = vmatprep.subr.bf16.mxu0 0
    %732 = vmatpush1.bf16.msra.mxu0 0
    %733 = vmatprep.subr.bf16.mxu0 0
    %734 = vmatpush1.bf16.msra.mxu0 0
    %735 = vmatprep.subr.bf16.mxu0 0
    %736 = vmatpush1.bf16.msra.mxu0 0
    %737 = vmatprep.subr.bf16.mxu0 0
    %738 = vmatpush1.bf16.msra.mxu0 0
    %739 = vmatprep.subr.bf16.mxu0 0
    %740 = vmatpush1.bf16.msra.mxu0 0
    %741 = vmatprep.mubr.bf16.mxu0 0
    %742 = vmatmul.mubr.bf16.gmra.mrb[0].mxu0 %v95
    %v743 = vpop.f32.mrb[0].mxu0
    %v744 = vadd.f32 %v406, %v743
    %v745 = vpop.f32.mrb[0].mxu0
    %v746 = vadd.f32 %v408, %v745
    %v747 = vpop.f32.mrb[0].mxu0
    %v748 = vadd.f32 %v410, %v747
    %v749 = vpop.f32.mrb[0].mxu0
    %v750 = vadd.f32 %v412, %v749
    %751 = vmatprep.mubr.bf16.mxu0 0
    %752 = vmatmul.mubr.bf16.gmra.mrb[0].mxu0 %v96
    %v753 = vpop.f32.mrb[0].mxu0
    %v754 = vadd.f32 %v416, %v753
    %v755 = vpop.f32.mrb[0].mxu0
    %v756 = vadd.f32 %v418, %v755
    %v757 = vpop.f32.mrb[0].mxu0
    %v758 = vadd.f32 %v420, %v757
    %v759 = vpop.f32.mrb[0].mxu0
    %v760 = vadd.f32 %v422, %v759
    %761 = vmatprep.mubr.bf16.mxu0 0
    %762 = vmatmul.mubr.bf16.gmra.mrb[0].mxu0 %v97
    %v763 = vpop.f32.mrb[0].mxu0
    %v764 = vadd.f32 %v426, %v763
    %v765 = vpop.f32.mrb[0].mxu0
    %v766 = vadd.f32 %v428, %v765
    %v767 = vpop.f32.mrb[0].mxu0
    %v768 = vadd.f32 %v430, %v767
    %v769 = vpop.f32.mrb[0].mxu0
    %v770 = vadd.f32 %v432, %v769
    %771 = vmatprep.mubr.bf16.mxu0 0
    %772 = vmatmul.mubr.bf16.gmra.mrb[0].mxu0 %v98
    %v773 = vpop.f32.mrb[0].mxu0
    %v774 = vadd.f32 %v436, %v773
    %v775 = vpop.f32.mrb[0].mxu0
    %v776 = vadd.f32 %v438, %v775
    %v777 = vpop.f32.mrb[0].mxu0
    %v778 = vadd.f32 %v440, %v777
    %v779 = vpop.f32.mrb[0].mxu0
    %v780 = vadd.f32 %v442, %v779
    %781 = vmatprep.mubr.bf16.mxu0 0
    %782 = vmatmul.mubr.bf16.gmra.mrb[0].mxu0 %v99
    %v783 = vpop.f32.mrb[0].mxu0
    %v784 = vadd.f32 %v446, %v783
    %v785 = vpop.f32.mrb[0].mxu0
    %v786 = vadd.f32 %v448, %v785
    %v787 = vpop.f32.mrb[0].mxu0
    %v788 = vadd.f32 %v450, %v787
    %v789 = vpop.f32.mrb[0].mxu0
    %v790 = vadd.f32 %v452, %v789
    %791 = vmatprep.mubr.bf16.mxu0 0
    %792 = vmatmul.mubr.bf16.gmra.mrb[0].mxu0 %v100
    %v793 = vpop.f32.mrb[0].mxu0
    %v794 = vadd.f32 %v456, %v793
    %v795 = vpop.f32.mrb[0].mxu0
    %v796 = vadd.f32 %v458, %v795
    %v797 = vpop.f32.mrb[0].mxu0
    %v798 = vadd.f32 %v460, %v797
    %v799 = vpop.f32.mrb[0].mxu0
    %v800 = vadd.f32 %v462, %v799
    %801 = vmatprep.mubr.bf16.mxu0 0
    %802 = vmatmul.mubr.bf16.gmra.mrb[0].mxu0 %v101
    %v803 = vpop.f32.mrb[0].mxu0
    %v804 = vadd.f32 %v466, %v803
    %v805 = vpop.f32.mrb[0].mxu0
    %v806 = vadd.f32 %v468, %v805
    %v807 = vpop.f32.mrb[0].mxu0
    %v808 = vadd.f32 %v470, %v807
    %v809 = vpop.f32.mrb[0].mxu0
    %v810 = vadd.f32 %v472, %v809
    %811 = vmatprep.mubr.bf16.mxu0 0
    %812 = vmatmul.mubr.bf16.gmra.mrb[0].mxu0 %v102
    %v813 = vpop.f32.mrb[0].mxu0
    %v814 = vadd.f32 %v476, %v813
    %v815 = vpop.f32.mrb[0].mxu0
    %v816 = vadd.f32 %v478, %v815
    %v817 = vpop.f32.mrb[0].mxu0
    %v818 = vadd.f32 %v480, %v817
    %v819 = vpop.f32.mrb[0].mxu0
    %v820 = vadd.f32 %v482, %v819
    %821 = vdwg.mxu0
    %822 = vmatprep.subr.bf16.mxu0 0
    %823 = vmatpush1.bf16.msra.mxu0 %v663
    %824 = vmatprep.subr.bf16.mxu0 0
    %825 = vmatpush1.bf16.msra.mxu0 %v666
    %826 = vmatprep.subr.bf16.mxu0 0
    %827 = vmatpush1.bf16.msra.mxu0 %v669
    %828 = vmatprep.subr.bf16.mxu0 0
    %829 = vmatpush1.bf16.msra.mxu0 %v672
    %830 = vmatprep.subr.bf16.mxu0 0
    %831 = vmatpush1.bf16.msra.mxu0 %v675
    %832 = vmatprep.subr.bf16.mxu0 0
    %833 = vmatpush1.bf16.msra.mxu0 %v678
    %834 = vmatprep.subr.bf16.mxu0 0
    %835 = vmatpush1.bf16.msra.mxu0 %v681
    %836 = vmatprep.subr.bf16.mxu0 0
    %837 = vmatpush1.bf16.msra.mxu0 %v684
    %838 = vmatprep.subr.bf16.mxu0 0
    %839 = vmatpush1.bf16.msra.mxu0 0
    %840 = vmatprep.subr.bf16.mxu0 0
    %841 = vmatpush1.bf16.msra.mxu0 0
    %842 = vmatprep.subr.bf16.mxu0 0
    %843 = vmatpush1.bf16.msra.mxu0 0
    %844 = vmatprep.subr.bf16.mxu0 0
    %845 = vmatpush1.bf16.msra.mxu0 0
    %846 = vmatprep.subr.bf16.mxu0 0
    %847 = vmatpush1.bf16.msra.mxu0 0
    %848 = vmatprep.subr.bf16.mxu0 0
    %849 = vmatpush1.bf16.msra.mxu0 0
    %850 = vmatprep.subr.bf16.mxu0 0
    %851 = vmatpush1.bf16.msra.mxu0 0
    %852 = vmatprep.subr.bf16.mxu0 0
    %853 = vmatpush1.bf16.msra.mxu0 0
    %854 = vmatprep.mubr.bf16.mxu0 0
    %855 = vmatmul.mubr.bf16.gmra.mrb[0].mxu0 %v95
    %v856 = vpop.f32.mrb[0].mxu0
    %v857 = vadd.f32 %v519, %v856
    %v858 = vpop.f32.mrb[0].mxu0
    %v859 = vpop.f32.mrb[0].mxu0
    %v860 = vadd.f32 %v522, %v859
    %v861 = vpop.f32.mrb[0].mxu0
    %862 = vmatprep.mubr.bf16.mxu0 0
    %863 = vmatmul.mubr.bf16.gmra.mrb[0].mxu0 %v96
    %v864 = vpop.f32.mrb[0].mxu0
    %v865 = vadd.f32 %v527, %v864
    %v866 = vpop.f32.mrb[0].mxu0
    %v867 = vpop.f32.mrb[0].mxu0
    %v868 = vadd.f32 %v530, %v867
    %v869 = vpop.f32.mrb[0].mxu0
    %870 = vmatprep.mubr.bf16.mxu0 0
    %871 = vmatmul.mubr.bf16.gmra.mrb[0].mxu0 %v97
    %v872 = vpop.f32.mrb[0].mxu0
    %v873 = vadd.f32 %v535, %v872
    %v874 = vpop.f32.mrb[0].mxu0
    %v875 = vpop.f32.mrb[0].mxu0
    %v876 = vadd.f32 %v538, %v875
    %v877 = vpop.f32.mrb[0].mxu0
    %878 = vmatprep.mubr.bf16.mxu0 0
    %879 = vmatmul.mubr.bf16.gmra.mrb[0].mxu0 %v98
    %v880 = vpop.f32.mrb[0].mxu0
    %v881 = vadd.f32 %v543, %v880
    %v882 = vpop.f32.mrb[0].mxu0
    %v883 = vpop.f32.mrb[0].mxu0
    %v884 = vadd.f32 %v546, %v883
    %v885 = vpop.f32.mrb[0].mxu0
    %886 = vmatprep.mubr.bf16.mxu0 0
    %887 = vmatmul.mubr.bf16.gmra.mrb[0].mxu0 %v99
    %v888 = vpop.f32.mrb[0].mxu0
    %v889 = vadd.f32 %v551, %v888
    %v890 = vpop.f32.mrb[0].mxu0
    %v891 = vpop.f32.mrb[0].mxu0
    %v892 = vadd.f32 %v554, %v891
    %v893 = vpop.f32.mrb[0].mxu0
    %894 = vmatprep.mubr.bf16.mxu0 0
    %895 = vmatmul.mubr.bf16.gmra.mrb[0].mxu0 %v100
    %v896 = vpop.f32.mrb[0].mxu0
    %v897 = vadd.f32 %v559, %v896
    %v898 = vpop.f32.mrb[0].mxu0
    %v899 = vpop.f32.mrb[0].mxu0
    %v900 = vadd.f32 %v562, %v899
    %v901 = vpop.f32.mrb[0].mxu0
    %902 = vmatprep.mubr.bf16.mxu0 0
    %903 = vmatmul.mubr.bf16.gmra.mrb[0].mxu0 %v101
    %v904 = vpop.f32.mrb[0].mxu0
    %v905 = vadd.f32 %v567, %v904
    %v906 = vpop.f32.mrb[0].mxu0
    %v907 = vpop.f32.mrb[0].mxu0
    %v908 = vadd.f32 %v570, %v907
    %v909 = vpop.f32.mrb[0].mxu0
    %910 = vmatprep.mubr.bf16.mxu0 0
    %911 = vmatmul.mubr.bf16.gmra.mrb[0].mxu0 %v102
    %v912 = vpop.f32.mrb[0].mxu0
    %v913 = vadd.f32 %v575, %v912
    %v914 = vpop.f32.mrb[0].mxu0
    %v915 = vpop.f32.mrb[0].mxu0
    %v916 = vadd.f32 %v578, %v915
    %v917 = vpop.f32.mrb[0].mxu0
    %918 = vdwg.mxu0
    %v919 = vmul.f32 %v744, %v744
    %v920 = vmul.f32 %v746, %v746
    %v921 = vmul.f32 %v857, %v857
    %v922 = vmul.f32 %v748, %v748
    %v923 = vmul.f32 %v750, %v750
    %v924 = vmul.f32 %v860, %v860
    %v925 = vmul.f32 %v754, %v754
    %v926 = vmul.f32 %v756, %v756
    %v927 = vmul.f32 %v865, %v865
    %v928 = vmul.f32 %v758, %v758
    %v929 = vmul.f32 %v760, %v760
    %v930 = vmul.f32 %v868, %v868
    %v931 = vmul.f32 %v764, %v764
    %v932 = vmul.f32 %v766, %v766
    %v933 = vmul.f32 %v873, %v873
    %v934 = vmul.f32 %v768, %v768
    %v935 = vmul.f32 %v770, %v770
    %v936 = vmul.f32 %v876, %v876
    %v937 = vmul.f32 %v774, %v774
    %v938 = vmul.f32 %v776, %v776
    %v939 = vmul.f32 %v881, %v881
    %v940 = vmul.f32 %v778, %v778
    %v941 = vmul.f32 %v780, %v780
    %v942 = vmul.f32 %v884, %v884
    %v943 = vmul.f32 %v784, %v784
    %v944 = vmul.f32 %v786, %v786
    %v945 = vmul.f32 %v889, %v889
    %v946 = vmul.f32 %v788, %v788
    %v947 = vmul.f32 %v790, %v790
    %v948 = vmul.f32 %v892, %v892
    %v949 = vmul.f32 %v794, %v794
    %v950 = vmul.f32 %v796, %v796
    %v951 = vmul.f32 %v897, %v897
    %v952 = vmul.f32 %v798, %v798
    %v953 = vmul.f32 %v800, %v800
    %v954 = vmul.f32 %v900, %v900
    %v955 = vmul.f32 %v804, %v804
    %v956 = vmul.f32 %v806, %v806
    %v957 = vmul.f32 %v905, %v905
    %v958 = vmul.f32 %v808, %v808
    %v959 = vmul.f32 %v810, %v810
    %v960 = vmul.f32 %v908, %v908
    %v961 = vmul.f32 %v814, %v814
    %v962 = vmul.f32 %v816, %v816
    %v963 = vmul.f32 %v913, %v913
    %v964 = vmul.f32 %v818, %v818
    %v965 = vmul.f32 %v820, %v820
    %v966 = vmul.f32 %v916, %v916
    %v967 = vpack.c.bf16 %v922, %v919
    %v968 = vpack.c.bf16 %v923, %v920
    %v969 = vpack.c.bf16 %v924, %v921
    %v970 = vpack.c.bf16 %v928, %v925
    %v971 = vpack.c.bf16 %v929, %v926
    %v972 = vpack.c.bf16 %v930, %v927
    %v973 = vpack.c.bf16 %v934, %v931
    %v974 = vpack.c.bf16 %v935, %v932
    %v975 = vpack.c.bf16 %v936, %v933
    %v976 = vpack.c.bf16 %v940, %v937
    %v977 = vpack.c.bf16 %v941, %v938
    %v978 = vpack.c.bf16 %v942, %v939
    %v979 = vpack.c.bf16 %v946, %v943
    %v980 = vpack.c.bf16 %v947, %v944
    %v981 = vpack.c.bf16 %v948, %v945
    %v982 = vpack.c.bf16 %v952, %v949
    %v983 = vpack.c.bf16 %v953, %v950
    %v984 = vpack.c.bf16 %v954, %v951
    %v985 = vpack.c.bf16 %v958, %v955
    %v986 = vpack.c.bf16 %v959, %v956
    %v987 = vpack.c.bf16 %v960, %v957
    %v988 = vpack.c.bf16 %v964, %v961
    %v989 = vpack.c.bf16 %v965, %v962
    %v990 = vpack.c.bf16 %v966, %v963
    %v991 = vld [vmem:[#allocation8] sm:$0xf]
    %v992 = vld [vmem:[#allocation8 + $0x4] sm:$0xf]
    %v993 = vld [vmem:[#allocation8 + $0x8] sm:$0xf]
    %v994 = vld [vmem:[#allocation8 + $0xc] sm:$0xf]
    %v995 = vld [vmem:[#allocation8 + $0x10] sm:$0xf]
    %v996 = vld [vmem:[#allocation8 + $0x14] sm:$0xf]
    %v997 = vld [vmem:[#allocation8 + $0x18] sm:$0xf]
    %v998 = vld [vmem:[#allocation8 + $0x1c] sm:$0xf]
    %v999 = vld [vmem:[#allocation8 + $0x20] sm:$0xf]
    %v1000 = vld [vmem:[#allocation8 + $0x24] sm:$0xf]
    %v1001 = vld [vmem:[#allocation8 + $0x28] sm:$0xf]
    %v1002 = vld [vmem:[#allocation8 + $0x2c] sm:$0xf]
    %v1003 = vld [vmem:[#allocation8 + $0x30] sm:$0xf]
    %v1004 = vld [vmem:[#allocation8 + $0x34] sm:$0xf]
    %v1005 = vld [vmem:[#allocation8 + $0x38] sm:$0xf]
    %v1006 = vld [vmem:[#allocation8 + $0x3c] sm:$0xf]
    %v1007 = vld [vmem:[#allocation8 + $0x40] sm:$0xf]
    %v1008 = vld [vmem:[#allocation8 + $0x44] sm:$0xf]
    %v1009 = vld [vmem:[#allocation8 + $0x48] sm:$0xf]
    %v1010 = vld [vmem:[#allocation8 + $0x4c] sm:$0xf]
    %v1011 = vld [vmem:[#allocation8 + $0x50] sm:$0xf]
    %v1012 = vld [vmem:[#allocation8 + $0x54] sm:$0xf]
    %v1013 = vld [vmem:[#allocation8 + $0x58] sm:$0xf]
    %v1014 = vld [vmem:[#allocation8 + $0x5c] sm:$0xf]
    %v1015 = vld [vmem:[#allocation8 + $0x60] sm:$0xf]
    %v1016 = vld [vmem:[#allocation8 + $0x64] sm:$0xf]
    %v1017 = vld [vmem:[#allocation8 + $0x68] sm:$0xf]
    %v1018 = vld [vmem:[#allocation8 + $0x6c] sm:$0xf]
    %v1019 = vld [vmem:[#allocation8 + $0x70] sm:$0xf]
    %v1020 = vld [vmem:[#allocation8 + $0x74] sm:$0xf]
    %v1021 = vld [vmem:[#allocation8 + $0x78] sm:$0xf]
    %v1022 = vld [vmem:[#allocation8 + $0x7c] sm:$0xf]
    %v1023 = vld [vmem:[#allocation8 + $0x80] sm:$0xf]
    %v1024 = vld [vmem:[#allocation8 + $0x84] sm:$0xf]
    %v1025 = vld [vmem:[#allocation8 + $0x88] sm:$0xf]
    %v1026 = vld [vmem:[#allocation8 + $0x8c] sm:$0xf]
    %v1027 = vld [vmem:[#allocation8 + $0x90] sm:$0xf]
    %v1028 = vld [vmem:[#allocation8 + $0x94] sm:$0xf]
    %v1029 = vld [vmem:[#allocation8 + $0x98] sm:$0xf]
    %v1030 = vld [vmem:[#allocation8 + $0x9c] sm:$0xf]
    %v1031 = vld [vmem:[#allocation8 + $0xa0] sm:$0xf]
    %v1032 = vld [vmem:[#allocation8 + $0xa4] sm:$0xf]
    %v1033 = vld [vmem:[#allocation8 + $0xa8] sm:$0xf]
    %v1034 = vld [vmem:[#allocation8 + $0xac] sm:$0xf]
    %v1035 = vld [vmem:[#allocation8 + $0xb0] sm:$0xf]
    %v1036 = vld [vmem:[#allocation8 + $0xb4] sm:$0xf]
    %v1037 = vld [vmem:[#allocation8 + $0xb8] sm:$0xf]
    %v1038 = vld [vmem:[#allocation8 + $0xbc] sm:$0xf]
    %v1087 = vunpack.c.l.b16 %v991
    %v1088 = vunpack.c.l.b16 %v992
    %v1089 = vunpack.c.l.b16 %v993
    %v1090 = vunpack.c.l.b16 %v994
    %v1091 = vunpack.c.l.b16 %v995
    %v1092 = vunpack.c.l.b16 %v996
    %v1093 = vunpack.c.l.b16 %v997
    %v1094 = vunpack.c.l.b16 %v998
    %v1095 = vunpack.c.l.b16 %v999
    %v1096 = vunpack.c.l.b16 %v1000
    %v1097 = vunpack.c.l.b16 %v1001
    %v1098 = vunpack.c.l.b16 %v1002
    %v1099 = vunpack.c.l.b16 %v1003
    %v1100 = vunpack.c.l.b16 %v1004
    %v1101 = vunpack.c.l.b16 %v1005
    %v1102 = vunpack.c.l.b16 %v1006
    %v1103 = vunpack.c.l.b16 %v1007
    %v1104 = vunpack.c.l.b16 %v1008
    %v1105 = vunpack.c.l.b16 %v1009
    %v1106 = vunpack.c.l.b16 %v1010
    %v1107 = vunpack.c.l.b16 %v1011
    %v1108 = vunpack.c.l.b16 %v1012
    %v1109 = vunpack.c.l.b16 %v1013
    %v1110 = vunpack.c.l.b16 %v1014
    %v1111 = vunpack.c.l.b16 %v1015
    %v1112 = vunpack.c.l.b16 %v1016
    %v1113 = vunpack.c.l.b16 %v1017
    %v1114 = vunpack.c.l.b16 %v1018
    %v1115 = vunpack.c.l.b16 %v1019
    %v1116 = vunpack.c.l.b16 %v1020
    %v1117 = vunpack.c.l.b16 %v1021
    %v1118 = vunpack.c.l.b16 %v1022
    %v1119 = vunpack.c.l.b16 %v1023
    %v1120 = vunpack.c.l.b16 %v1024
    %v1121 = vunpack.c.l.b16 %v1025
    %v1122 = vunpack.c.l.b16 %v1026
    %v1123 = vunpack.c.l.b16 %v1027
    %v1124 = vunpack.c.l.b16 %v1028
    %v1125 = vunpack.c.l.b16 %v1029
    %v1126 = vunpack.c.l.b16 %v1030
    %v1127 = vunpack.c.l.b16 %v1031
    %v1128 = vunpack.c.l.b16 %v1032
    %v1129 = vunpack.c.l.b16 %v1033
    %v1130 = vunpack.c.l.b16 %v1034
    %v1131 = vunpack.c.l.b16 %v1035
    %v1132 = vunpack.c.l.b16 %v1036
    %v1133 = vunpack.c.l.b16 %v1037
    %v1134 = vunpack.c.l.b16 %v1038
    %v1135 = vpack.c.b16 %v1088, %v1087
    %v1136 = vpack.c.b16 %v1090, %v1089
    %v1137 = vpack.c.b16 %v1092, %v1091
    %v1138 = vpack.c.b16 %v1094, %v1093
    %v1139 = vpack.c.b16 %v1096, %v1095
    %v1140 = vpack.c.b16 %v1098, %v1097
    %v1141 = vpack.c.b16 %v1100, %v1099
    %v1142 = vpack.c.b16 %v1102, %v1101
    %v1143 = vpack.c.b16 %v1104, %v1103
    %v1144 = vpack.c.b16 %v1106, %v1105
    %v1145 = vpack.c.b16 %v1108, %v1107
    %v1146 = vpack.c.b16 %v1110, %v1109
    %v1147 = vpack.c.b16 %v1112, %v1111
    %v1148 = vpack.c.b16 %v1114, %v1113
    %v1149 = vpack.c.b16 %v1116, %v1115
    %v1150 = vpack.c.b16 %v1118, %v1117
    %v1151 = vpack.c.b16 %v1120, %v1119
    %v1152 = vpack.c.b16 %v1122, %v1121
    %v1153 = vpack.c.b16 %v1124, %v1123
    %v1154 = vpack.c.b16 %v1126, %v1125
    %v1155 = vpack.c.b16 %v1128, %v1127
    %v1156 = vpack.c.b16 %v1130, %v1129
    %v1157 = vpack.c.b16 %v1132, %v1131
    %v1158 = vpack.c.b16 %v1134, %v1133
    %1183 = vmatprep.subr.bf16.mxu0 0
    %1184 = vmatpush1.bf16.msra.mxu0 %v1135
    %1185 = vmatprep.subr.bf16.mxu0 0
    %1186 = vmatpush1.bf16.msra.mxu0 %v1136
    %1187 = vmatprep.subr.bf16.mxu0 0
    %1188 = vmatpush1.bf16.msra.mxu0 %v1137
    %1189 = vmatprep.subr.bf16.mxu0 0
    %1190 = vmatpush1.bf16.msra.mxu0 %v1138
    %1191 = vmatprep.subr.bf16.mxu0 0
    %1192 = vmatpush1.bf16.msra.mxu0 %v1139
    %1193 = vmatprep.subr.bf16.mxu0 0
    %1194 = vmatpush1.bf16.msra.mxu0 %v1140
    %1195 = vmatprep.subr.bf16.mxu0 0
    %1196 = vmatpush1.bf16.msra.mxu0 %v1141
    %1197 = vmatprep.subr.bf16.mxu0 0
    %1198 = vmatpush1.bf16.msra.mxu0 %v1142
    %1199 = vmatprep.subr.bf16.mxu0 0
    %1200 = vmatpush1.bf16.msra.mxu0 %v1143
    %1201 = vmatprep.subr.bf16.mxu0 0
    %1202 = vmatpush1.bf16.msra.mxu0 %v1144
    %1203 = vmatprep.subr.bf16.mxu0 0
    %1204 = vmatpush1.bf16.msra.mxu0 %v1145
    %1205 = vmatprep.subr.bf16.mxu0 0
    %1206 = vmatpush1.bf16.msra.mxu0 %v1146
    %1207 = vmatprep.subr.bf16.mxu0 0
    %1208 = vmatpush1.bf16.msra.mxu0 %v1147
    %1209 = vmatprep.subr.bf16.mxu0 0
    %1210 = vmatpush1.bf16.msra.mxu0 %v1148
    %1211 = vmatprep.subr.bf16.mxu0 0
    %1212 = vmatpush1.bf16.msra.mxu0 %v1149
    %1213 = vmatprep.subr.bf16.mxu0 0
    %1214 = vmatpush1.bf16.msra.mxu0 %v1150
    %1215 = vmatprep.mubr.bf16.mxu0 %v968
    %1216 = vmatmul.mubr.bf16.gmra.mrb[0].mxu0 %v967
    %v1217 = vpop.f32.mrb[0].mxu0
    %v1218 = vadd.f32 0.0, %v1217
    %v1219 = vpop.f32.mrb[0].mxu0
    %v1220 = vpop.f32.mrb[0].mxu0
    %v1221 = vadd.f32 0.0, %v1220
    %v1222 = vpop.f32.mrb[0].mxu0
    %1223 = vmatprep.mubr.bf16.mxu0 %v971
    %1224 = vmatmul.mubr.bf16.gmra.mrb[0].mxu0 %v970
    %v1225 = vpop.f32.mrb[0].mxu0
    %v1226 = vadd.f32 0.0, %v1225
    %v1227 = vpop.f32.mrb[0].mxu0
    %v1228 = vpop.f32.mrb[0].mxu0
    %v1229 = vadd.f32 0.0, %v1228
    %v1230 = vpop.f32.mrb[0].mxu0
    %1231 = vmatprep.mubr.bf16.mxu0 %v974
    %1232 = vmatmul.mubr.bf16.gmra.mrb[0].mxu0 %v973
    %v1233 = vpop.f32.mrb[0].mxu0
    %v1234 = vadd.f32 0.0, %v1233
    %v1235 = vpop.f32.mrb[0].mxu0
    %v1236 = vpop.f32.mrb[0].mxu0
    %v1237 = vadd.f32 0.0, %v1236
    %v1238 = vpop.f32.mrb[0].mxu0
    %1239 = vmatprep.mubr.bf16.mxu0 %v977
    %1240 = vmatmul.mubr.bf16.gmra.mrb[0].mxu0 %v976
    %v1241 = vpop.f32.mrb[0].mxu0
    %v1242 = vadd.f32 0.0, %v1241
    %v1243 = vpop.f32.mrb[0].mxu0
    %v1244 = vpop.f32.mrb[0].mxu0
    %v1245 = vadd.f32 0.0, %v1244
    %v1246 = vpop.f32.mrb[0].mxu0
    %1247 = vmatprep.mubr.bf16.mxu0 %v980
    %1248 = vmatmul.mubr.bf16.gmra.mrb[0].mxu0 %v979
    %v1249 = vpop.f32.mrb[0].mxu0
    %v1250 = vadd.f32 0.0, %v1249
    %v1251 = vpop.f32.mrb[0].mxu0
    %v1252 = vpop.f32.mrb[0].mxu0
    %v1253 = vadd.f32 0.0, %v1252
    %v1254 = vpop.f32.mrb[0].mxu0
    %1255 = vmatprep.mubr.bf16.mxu0 %v983
    %1256 = vmatmul.mubr.bf16.gmra.mrb[0].mxu0 %v982
    %v1257 = vpop.f32.mrb[0].mxu0
    %v1258 = vadd.f32 0.0, %v1257
    %v1259 = vpop.f32.mrb[0].mxu0
    %v1260 = vpop.f32.mrb[0].mxu0
    %v1261 = vadd.f32 0.0, %v1260
    %v1262 = vpop.f32.mrb[0].mxu0
    %1263 = vmatprep.mubr.bf16.mxu0 %v986
    %1264 = vmatmul.mubr.bf16.gmra.mrb[0].mxu0 %v985
    %v1265 = vpop.f32.mrb[0].mxu0
    %v1266 = vadd.f32 0.0, %v1265
    %v1267 = vpop.f32.mrb[0].mxu0
    %v1268 = vpop.f32.mrb[0].mxu0
    %v1269 = vadd.f32 0.0, %v1268
    %v1270 = vpop.f32.mrb[0].mxu0
    %1271 = vmatprep.mubr.bf16.mxu0 %v989
    %1272 = vmatmul.mubr.bf16.gmra.mrb[0].mxu0 %v988
    %v1273 = vpop.f32.mrb[0].mxu0
    %v1274 = vadd.f32 0.0, %v1273
    %v1275 = vpop.f32.mrb[0].mxu0
    %v1276 = vpop.f32.mrb[0].mxu0
    %v1277 = vadd.f32 0.0, %v1276
    %v1278 = vpop.f32.mrb[0].mxu0
    %1279 = vdwg.mxu0
    %1280 = vmatprep.subr.bf16.mxu0 0
    %1281 = vmatpush1.bf16.msra.mxu0 %v1151
    %1282 = vmatprep.subr.bf16.mxu0 0
    %1283 = vmatpush1.bf16.msra.mxu0 %v1152
    %1284 = vmatprep.subr.bf16.mxu0 0
    %1285 = vmatpush1.bf16.msra.mxu0 %v1153
    %1286 = vmatprep.subr.bf16.mxu0 0
    %1287 = vmatpush1.bf16.msra.mxu0 %v1154
    %1288 = vmatprep.subr.bf16.mxu0 0
    %1289 = vmatpush1.bf16.msra.mxu0 %v1155
    %1290 = vmatprep.subr.bf16.mxu0 0
    %1291 = vmatpush1.bf16.msra.mxu0 %v1156
    %1292 = vmatprep.subr.bf16.mxu0 0
    %1293 = vmatpush1.bf16.msra.mxu0 %v1157
    %1294 = vmatprep.subr.bf16.mxu0 0
    %1295 = vmatpush1.bf16.msra.mxu0 %v1158
    %1296 = vmatprep.subr.bf16.mxu0 0
    %1297 = vmatpush1.bf16.msra.mxu0 0
    %1298 = vmatprep.subr.bf16.mxu0 0
    %1299 = vmatpush1.bf16.msra.mxu0 0
    %1300 = vmatprep.subr.bf16.mxu0 0
    %1301 = vmatpush1.bf16.msra.mxu0 0
    %1302 = vmatprep.subr.bf16.mxu0 0
    %1303 = vmatpush1.bf16.msra.mxu0 0
    %1304 = vmatprep.subr.bf16.mxu0 0
    %1305 = vmatpush1.bf16.msra.mxu0 0
    %1306 = vmatprep.subr.bf16.mxu0 0
    %1307 = vmatpush1.bf16.msra.mxu0 0
    %1308 = vmatprep.subr.bf16.mxu0 0
    %1309 = vmatpush1.bf16.msra.mxu0 0
    %1310 = vmatprep.subr.bf16.mxu0 0
    %1311 = vmatpush1.bf16.msra.mxu0 0
    %1312 = vmatprep.mubr.bf16.mxu0 0
    %1313 = vmatmul.mubr.bf16.gmra.mrb[0].mxu0 %v969
    %v1314 = vpop.f32.mrb[0].mxu0
    %v1315 = vadd.f32 %v1218, %v1314
    %v1316 = vpop.f32.mrb[0].mxu0
    %v1317 = vpop.f32.mrb[0].mxu0
    %v1318 = vadd.f32 %v1221, %v1317
    %v1319 = vpop.f32.mrb[0].mxu0
    %1320 = vmatprep.mubr.bf16.mxu0 0
    %1321 = vmatmul.mubr.bf16.gmra.mrb[0].mxu0 %v972
    %v1322 = vpop.f32.mrb[0].mxu0
    %v1323 = vadd.f32 %v1226, %v1322
    %v1324 = vpop.f32.mrb[0].mxu0
    %v1325 = vpop.f32.mrb[0].mxu0
    %v1326 = vadd.f32 %v1229, %v1325
    %v1327 = vpop.f32.mrb[0].mxu0
    %1328 = vmatprep.mubr.bf16.mxu0 0
    %1329 = vmatmul.mubr.bf16.gmra.mrb[0].mxu0 %v975
    %v1330 = vpop.f32.mrb[0].mxu0
    %v1331 = vadd.f32 %v1234, %v1330
    %v1332 = vpop.f32.mrb[0].mxu0
    %v1333 = vpop.f32.mrb[0].mxu0
    %v1334 = vadd.f32 %v1237, %v1333
    %v1335 = vpop.f32.mrb[0].mxu0
    %1336 = vmatprep.mubr.bf16.mxu0 0
    %1337 = vmatmul.mubr.bf16.gmra.mrb[0].mxu0 %v978
    %v1338 = vpop.f32.mrb[0].mxu0
    %v1339 = vadd.f32 %v1242, %v1338
    %v1340 = vpop.f32.mrb[0].mxu0
    %v1341 = vpop.f32.mrb[0].mxu0
    %v1342 = vadd.f32 %v1245, %v1341
    %v1343 = vpop.f32.mrb[0].mxu0
    %1344 = vmatprep.mubr.bf16.mxu0 0
    %1345 = vmatmul.mubr.bf16.gmra.mrb[0].mxu0 %v981
    %v1346 = vpop.f32.mrb[0].mxu0
    %v1347 = vadd.f32 %v1250, %v1346
    %v1348 = vpop.f32.mrb[0].mxu0
    %v1349 = vpop.f32.mrb[0].mxu0
    %v1350 = vadd.f32 %v1253, %v1349
    %v1351 = vpop.f32.mrb[0].mxu0
    %1352 = vmatprep.mubr.bf16.mxu0 0
    %1353 = vmatmul.mubr.bf16.gmra.mrb[0].mxu0 %v984
    %v1354 = vpop.f32.mrb[0].mxu0
    %v1355 = vadd.f32 %v1258, %v1354
    %v1356 = vpop.f32.mrb[0].mxu0
    %v1357 = vpop.f32.mrb[0].mxu0
    %v1358 = vadd.f32 %v1261, %v1357
    %v1359 = vpop.f32.mrb[0].mxu0
    %1360 = vmatprep.mubr.bf16.mxu0 0
    %1361 = vmatmul.mubr.bf16.gmra.mrb[0].mxu0 %v987
    %v1362 = vpop.f32.mrb[0].mxu0
    %v1363 = vadd.f32 %v1266, %v1362
    %v1364 = vpop.f32.mrb[0].mxu0
    %v1365 = vpop.f32.mrb[0].mxu0
    %v1366 = vadd.f32 %v1269, %v1365
    %v1367 = vpop.f32.mrb[0].mxu0
    %1368 = vmatprep.mubr.bf16.mxu0 0
    %1369 = vmatmul.mubr.bf16.gmra.mrb[0].mxu0 %v990
    %v1370 = vpop.f32.mrb[0].mxu0
    %v1371 = vadd.f32 %v1274, %v1370
    %v1372 = vpop.f32.mrb[0].mxu0
    %v1373 = vpop.f32.mrb[0].mxu0
    %v1374 = vadd.f32 %v1277, %v1373
    %v1375 = vpop.f32.mrb[0].mxu0
    %1376 = vdwg.mxu0
    %v1377 = vmax.f32 %v1315, 1e-09
    %v1378 = vmax.f32 %v1318, 1e-09
    %v1379 = vmax.f32 %v1323, 1e-09
    %v1380 = vmax.f32 %v1326, 1e-09
    %v1381 = vmax.f32 %v1331, 1e-09
    %v1382 = vmax.f32 %v1334, 1e-09
    %v1383 = vmax.f32 %v1339, 1e-09
    %v1384 = vmax.f32 %v1342, 1e-09
    %v1385 = vmax.f32 %v1347, 1e-09
    %v1386 = vmax.f32 %v1350, 1e-09
    %v1387 = vmax.f32 %v1355, 1e-09
    %v1388 = vmax.f32 %v1358, 1e-09
    %v1389 = vmax.f32 %v1363, 1e-09
    %v1390 = vmax.f32 %v1366, 1e-09
    %v1391 = vmax.f32 %v1371, 1e-09
    %v1392 = vmax.f32 %v1374, 1e-09
    %v1393 = vlog2.pop %v1377
    %v1394 = vmul.f32 %v1393, 0.6931472
    %v1395 = vlog2.pop %v1378
    %v1396 = vmul.f32 %v1395, 0.6931472
    %v1397 = vlog2.pop %v1379
    %v1398 = vmul.f32 %v1397, 0.6931472
    %v1399 = vlog2.pop %v1380
    %v1400 = vmul.f32 %v1399, 0.6931472
    %v1401 = vlog2.pop %v1381
    %v1402 = vmul.f32 %v1401, 0.6931472
    %v1403 = vlog2.pop %v1382
    %v1404 = vmul.f32 %v1403, 0.6931472
    %v1405 = vlog2.pop %v1383
    %v1406 = vmul.f32 %v1405, 0.6931472
    %v1407 = vlog2.pop %v1384
    %v1408 = vmul.f32 %v1407, 0.6931472
    %v1409 = vlog2.pop %v1385
    %v1410 = vmul.f32 %v1409, 0.6931472
    %v1411 = vlog2.pop %v1386
    %v1412 = vmul.f32 %v1411, 0.6931472
    %v1413 = vlog2.pop %v1387
    %v1414 = vmul.f32 %v1413, 0.6931472
    %v1415 = vlog2.pop %v1388
    %v1416 = vmul.f32 %v1415, 0.6931472
    %v1417 = vlog2.pop %v1389
    %v1418 = vmul.f32 %v1417, 0.6931472
    %v1419 = vlog2.pop %v1390
    %v1420 = vmul.f32 %v1419, 0.6931472
    %v1421 = vlog2.pop %v1391
    %v1422 = vmul.f32 %v1421, 0.6931472
    %v1423 = vlog2.pop %v1392
    %v1424 = vmul.f32 %v1423, 0.6931472
    %1425 = vst [vmem:[#allocation10] sm:$0xff] %v1394
    %1426 = vst [vmem:[#allocation10 + $0x8] sm:$0xff] %v1396
    %1427 = vst [vmem:[#allocation10 + $0x10] sm:$0xff] %v1398
    %1428 = vst [vmem:[#allocation10 + $0x18] sm:$0xff] %v1400
    %1429 = vst [vmem:[#allocation10 + $0x20] sm:$0xff] %v1402
    %1430 = vst [vmem:[#allocation10 + $0x28] sm:$0xff] %v1404
    %1431 = vst [vmem:[#allocation10 + $0x30] sm:$0xff] %v1406
    %1432 = vst [vmem:[#allocation10 + $0x38] sm:$0xff] %v1408
    %1433 = vst [vmem:[#allocation10 + $0x40] sm:$0xff] %v1410
    %1434 = vst [vmem:[#allocation10 + $0x48] sm:$0xff] %v1412
    %1435 = vst [vmem:[#allocation10 + $0x50] sm:$0xff] %v1414
    %1436 = vst [vmem:[#allocation10 + $0x58] sm:$0xff] %v1416
    %1437 = vst [vmem:[#allocation10 + $0x60] sm:$0xff] %v1418
    %1438 = vst [vmem:[#allocation10 + $0x68] sm:$0xff] %v1420
    %1439 = vst [vmem:[#allocation10 + $0x70] sm:$0xff] %v1422
    %1440 = vst [vmem:[#allocation10 + $0x78] sm:$0xff] %v1424
    // Predicated region
    $region34: #{tpu_custom_call.1} parent=1 // pred_check
      _
    $region35: #{tpu_custom_call.1} parent=1 // pred_check_branch
      %1442 = sbr.rel (0) target = $region37
    $region36: #{tpu_custom_call.1} parent=1 // pred_region
      %s1444 = ssub.s32 2048, 2048
      %1445 = vsyncadd [#allocation4], %s1444
      %s1446 = sshll.u32 [#allocation10], 4
      %s1447 = int_to_ptr.vmem [resolvable:$true] %s1446
      %1452 = dma.vmem_to_hbm [thread:$0]  %s1447, 2048, %s4, [#allocation4], 128, 128, 8
    $region37: #{tpu_custom_call.1} parent=1 // pred_fallthru
      _
    // Predicated region
    $region38: #{tpu_custom_call.1} parent=1 // pred_check
      _
    $region39: #{tpu_custom_call.1} parent=1 // pred_check_branch
      %1454 = sbr.rel (0) target = $region41
    $region40: #{tpu_custom_call.1} parent=1 // pred_region
      %1455 = dma.done [#allocation4], 2048
    $region41: #{tpu_custom_call.1} parent=1 // pred_fallthru
      _
    %1456 = vsyncpa [#allocation3], 1
    %1457 = vsyncpa [#allocation6], 1
    %1458 = vsyncpa [#allocation9], 1
    %1459 = vsyncpa [#allocation4], 1

</llo_original>
